<compile_context>
chip_gen: v5e
topology: v5e:2x2
jax: 0.10.0
libtpu: 0.0.40
codegen_flags: <defaults>
</compile_context>

<pallas_src>
import jax
import jax.numpy as jnp
from jax.experimental import pallas as pl
from jax.experimental.pallas import tpu as pltpu


def _mask_gather_kernel(idx_ref, x_ref, out_ref):
    """One grid step gathers the unmasked rows of Bt batches.

    idx_ref: (Bt, M, 1) int32  unmasked patch indices.
    x_ref:   (Bt, N, D)        patch embeddings (with positional encoding).
    out_ref: (Bt, M, D)        unmasked patches only.
    """
    bt, m, _ = idx_ref.shape
    n = x_ref.shape[1]

    # One-hot selection matrix: onehot[b, j, p] = (unmasked_idx[b, j] == p).
    # idx arrives as (Bt, M, 1) so M already sits on sublanes; the broadcast
    # along the lane (patch) axis is free — no cross-lane relayout needed.
    patch_iota = jax.lax.broadcasted_iota(jnp.int32, (bt, m, n), 2)
    onehot = jnp.where(
        idx_ref[...] == patch_iota, jnp.float32(1.0), jnp.float32(0.0)
    ).astype(jnp.bfloat16)  # values 0/1: exact in bf16

    x = x_ref[...]
    if x.dtype == jnp.float32:
        # Split each f32 row into three bf16-exact components so the native
        # bf16 x bf16 -> f32 MXU path reproduces the f32 values exactly
        # (every output element is 1.0 * piece + zeros).  Mem-bound kernel:
        # the extra MXU passes are hidden under the HBM DMA.
        x_hi = x.astype(jnp.bfloat16)
        r1 = x - x_hi.astype(jnp.float32)
        x_mid = r1.astype(jnp.bfloat16)
        x_lo = (r1 - x_mid.astype(jnp.float32)).astype(jnp.bfloat16)
        pieces = (x_hi, x_mid, x_lo)
    else:
        pieces = (x,)

    gathered = None
    for piece in pieces:
        g = jnp.einsum(
            "bjp,bpd->bjd",
            onehot.astype(piece.dtype),
            piece,
            preferred_element_type=jnp.float32,
        )
        gathered = g if gathered is None else gathered + g

    out_ref[...] = gathered.astype(out_ref.dtype)


def _pick_batch_block(B, N, M, D, itemsize, vmem_budget_bytes=8 * 1024 * 1024):
    """Largest Bt dividing B whose double-buffered blocks fit the budget.

    Budget stays well under the default scoped VMEM limits (16 MiB v5e,
    32 MiB v6e/v7x) and v7x's 64 MiB physical VMEM, so no vmem_limit_bytes
    override is required.
    """
    per_batch = 2 * itemsize * (N * D + M * D) + 2 * 4 * M * 128  # in+out (+idx, lane-padded)
    bt = max(1, min(B, vmem_budget_bytes // max(per_batch, 1)))
    while B % bt:
        bt -= 1
    return bt


def mask_forward(patch_embeddings, key, masking_percentage=0.5):
    """Mirror of Mask.forward.

    Returns:
        unmasked_patches_only: (B, num_unmasked, D)
        bool_mask:             (B, N) bool, True for masked patches
        masked_indices:        (B, num_masked) int32   (stacked, not a list)
        unmasked_indices:      (B, num_unmasked) int32 (stacked, not a list)
    """
    B, N, D = patch_embeddings.shape
    num_masked = int(masking_percentage * N)
    num_unmasked = N - num_masked

    # Per-batch random permutation (== torch.rand(B, N).argsort(dim=1)); the
    # 'random' strategy and its fallback in the reference module are identical.
    rand = jax.random.uniform(key, (B, N))
    perm = jnp.argsort(rand, axis=1).astype(jnp.int32)
    masked_idx = perm[:, :num_masked]
    unmasked_idx = perm[:, num_masked:]

    # bool_mask via rank test instead of a scatter: patch p is masked iff its
    # position inside perm is < num_masked.
    bool_mask = jnp.argsort(perm, axis=1) < num_masked

    Bt = _pick_batch_block(B, N, num_unmasked, D, patch_embeddings.dtype.itemsize)

    # (B, M, 1) layout puts the gather index on sublanes inside the kernel.
    idx_in = unmasked_idx[:, :, None]

    out_unmasked = pl.pallas_call(
        _mask_gather_kernel,
        grid=(B // Bt,),
        in_specs=[
            pl.BlockSpec((Bt, num_unmasked, 1), lambda b: (b, 0, 0)),
            pl.BlockSpec((Bt, N, D), lambda b: (b, 0, 0)),
        ],
        out_specs=pl.BlockSpec((Bt, num_unmasked, D), lambda b: (b, 0, 0)),
        out_shape=jax.ShapeDtypeStruct((B, num_unmasked, D), patch_embeddings.dtype),
        compiler_params=pltpu.CompilerParams(
            dimension_semantics=("parallel",),  # batch blocks megacore-shard on v7x
        ),
    )(idx_in, patch_embeddings)

    # The torch module returns per-batch Python index lists; the stacked
    # (B, k) arrays are the jit-friendly equivalent (slice per batch if needed).
    return out_unmasked, bool_mask, masked_idx, unmasked_idx


if __name__ == "__main__":
    key = jax.random.PRNGKey(0)
    k_x, k_perm = jax.random.split(key)

    B, N, D = 2, 16, 32          # batch, num_patches, embed_dim
    masking_percentage = 0.5     # -> 8 masked, 8 unmasked patches

    patch_embeddings = jax.random.normal(k_x, (B, N, D), dtype=jnp.float32)

    out_unmasked, bool_mask, masked_idx, unmasked_idx = mask_forward(
        patch_embeddings, k_perm, masking_percentage
    )
    jax.block_until_ready(out_unmasked)
    jax.block_until_ready(bool_mask)

    # Pure-JAX reference.
    rand = jax.random.uniform(k_perm, (B, N))
    perm = jnp.argsort(rand, axis=1).astype(jnp.int32)
    num_masked = int(masking_percentage * N)
    masked_idx_ref = perm[:, :num_masked]
    unmasked_idx_ref = perm[:, num_masked:]
    ref_unmasked = jnp.take_along_axis(
        patch_embeddings, unmasked_idx_ref[:, :, None], axis=1
    )
    ref_mask = (
        jnp.zeros((B, N), dtype=jnp.bool_)
        .at[jnp.arange(B)[:, None], masked_idx_ref]
        .set(True)
    )

    assert out_unmasked.shape == (B, N - num_masked, D)
    assert bool_mask.shape == (B, N) and bool_mask.dtype == jnp.bool_
    assert jnp.allclose(out_unmasked, ref_unmasked, rtol=1e-6, atol=1e-6)
    assert jnp.array_equal(bool_mask, ref_mask)
    assert jnp.array_equal(masked_idx, masked_idx_ref)
    assert jnp.array_equal(unmasked_idx, unmasked_idx_ref)

    print("KERNEL_OK")
</pallas_src>

<mosaic_0001>
module attributes {stable_mosaic.version = 11 : i64} {
  func.func @_mask_gather_kernel(%arg0: i32, %arg1: memref<2x8x1xi32, #tpu.memory_space<vmem>>, %arg2: memref<2x16x32xf32, #tpu.memory_space<vmem>>, %arg3: memref<2x8x32xf32, #tpu.memory_space<vmem>>) attributes {dimension_semantics = [#tpu.dimension_semantics<parallel>], iteration_bounds = array<i64: 1>, scalar_prefetch = 0 : i64, scratch_operands = 0 : i64, tpu.core_type = #tpu.core_type<tc>, window_params = [{transform_indices = @transform_0, window_bounds = array<i64: 2, 8, 1>}, {transform_indices = @transform_1, window_bounds = array<i64: 2, 16, 32>}, {transform_indices = @transform_2, window_bounds = array<i64: 2, 8, 32>}]} {
    %0 = tpu.iota {dimensions = array<i32: 2>} : vector<2x8x16xi32>
    %c0 = arith.constant 0 : index
    %c0_0 = arith.constant 0 : index
    %c0_1 = arith.constant 0 : index
    %1 = vector.load %arg1[%c0, %c0_0, %c0_1] : memref<2x8x1xi32, #tpu.memory_space<vmem>>, vector<2x8x1xi32>
    %2 = vector.broadcast %1 : vector<2x8x1xi32> to vector<2x8x16xi32>
    %3 = arith.cmpi eq, %2, %0 : vector<2x8x16xi32>
    %cst = arith.constant 1.000000e+00 : f32
    %cst_2 = arith.constant 0.000000e+00 : f32
    %4 = vector.broadcast %cst : f32 to vector<2x8x16xf32>
    %5 = vector.broadcast %cst_2 : f32 to vector<2x8x16xf32>
    %6 = arith.select %3, %4, %5 : vector<2x8x16xi1>, vector<2x8x16xf32>
    %7 = arith.truncf %6 : vector<2x8x16xf32> to vector<2x8x16xbf16>
    %c0_3 = arith.constant 0 : index
    %c0_4 = arith.constant 0 : index
    %c0_5 = arith.constant 0 : index
    %8 = vector.load %arg2[%c0_3, %c0_4, %c0_5] : memref<2x16x32xf32, #tpu.memory_space<vmem>>, vector<2x16x32xf32>
    %9 = arith.truncf %8 : vector<2x16x32xf32> to vector<2x16x32xbf16>
    %10 = arith.extf %9 : vector<2x16x32xbf16> to vector<2x16x32xf32>
    %11 = arith.subf %8, %10 : vector<2x16x32xf32>
    %12 = arith.truncf %11 : vector<2x16x32xf32> to vector<2x16x32xbf16>
    %13 = arith.extf %12 : vector<2x16x32xbf16> to vector<2x16x32xf32>
    %14 = arith.subf %11, %13 : vector<2x16x32xf32>
    %15 = arith.truncf %14 : vector<2x16x32xf32> to vector<2x16x32xbf16>
    "tpu.trace_start"() <{level = 10 : i32, message = "bjp,bpd->bjd"}> : () -> ()
    %cst_6 = arith.constant dense<0.000000e+00> : vector<2x8x32xf32>
    %16 = tpu.matmul %7, %9, %cst_6 {dimension_numbers = #tpu.dot_dimension_numbers<[2], [1], [1], [2], [0, 0, 0, 1, 1, 2], [0], [0]>} : vector<2x8x16xbf16>, vector<2x16x32xbf16>, vector<2x8x32xf32> -> vector<2x8x32xf32>
    %cst_7 = arith.constant dense<0.000000e+00> : vector<2x8x32xf32>
    %17 = tpu.matmul %7, %12, %cst_7 {dimension_numbers = #tpu.dot_dimension_numbers<[2], [1], [1], [2], [0, 0, 0, 1, 1, 2], [0], [0]>} : vector<2x8x16xbf16>, vector<2x16x32xbf16>, vector<2x8x32xf32> -> vector<2x8x32xf32>
    "tpu.trace_stop"() : () -> ()
    %18 = arith.addf %16, %17 : vector<2x8x32xf32>
    "tpu.trace_start"() <{level = 10 : i32, message = "bjp,bpd->bjd"}> : () -> ()
    %cst_8 = arith.constant dense<0.000000e+00> : vector<2x8x32xf32>
    %19 = tpu.matmul %7, %15, %cst_8 {dimension_numbers = #tpu.dot_dimension_numbers<[2], [1], [1], [2], [0, 0, 0, 1, 1, 2], [0], [0]>} : vector<2x8x16xbf16>, vector<2x16x32xbf16>, vector<2x8x32xf32> -> vector<2x8x32xf32>
    "tpu.trace_stop"() : () -> ()
    %20 = arith.addf %18, %19 : vector<2x8x32xf32>
    %c0_9 = arith.constant 0 : index
    %c0_10 = arith.constant 0 : index
    %c0_11 = arith.constant 0 : index
    %21 = vector.load %arg3[%c0_9, %c0_10, %c0_11] : memref<2x8x32xf32, #tpu.memory_space<vmem>>, vector<2x8x32xf32>
    tpu.vector_store %arg3[%c0_9, %c0_10, %c0_11], %20 {strides = array<i32>} : memref<2x8x32xf32, #tpu.memory_space<vmem>>, vector<2x8x32xf32>,
    return
  }
  func.func @transform_0(%arg0: i32) -> (i32, i32, i32) {
    %c0_i32 = arith.constant 0 : i32
    %c0_i32_0 = arith.constant 0 : i32
    %c0_i32_1 = arith.constant 0 : i32
    return %arg0, %c0_i32, %c0_i32_0 : i32, i32, i32
  }
  func.func @transform_1(%arg0: i32) -> (i32, i32, i32) {
    %c0_i32 = arith.constant 0 : i32
    %c0_i32_0 = arith.constant 0 : i32
    %c0_i32_1 = arith.constant 0 : i32
    return %arg0, %c0_i32, %c0_i32_0 : i32, i32, i32
  }
  func.func @transform_2(%arg0: i32) -> (i32, i32, i32) {
    %c0_i32 = arith.constant 0 : i32
    %c0_i32_0 = arith.constant 0 : i32
    %c0_i32_1 = arith.constant 0 : i32
    return %arg0, %c0_i32, %c0_i32_0 : i32, i32, i32
  }
}

</mosaic_0001>

<llo_original>
// kernel: tpu_custom_call.1
$region0: #{tpu_custom_call.1}
  #allocation0 [shape = 'u32[]', space=smem, size = 0x4, offset = 0x4, fixed_abs, tag = 'smem constant byte address 0x4 - core index']
  #allocation1 [shape = 'u32[72,128]{1,0:T(1,128)}', space=vmem, size = 0x9000, scoped, tag = 'internal scratch']
  %s0 = inlined_call_operand.vmem [shape: s32[2,8,1], index: 0, kind: input, shape index: {}]
  %s1 = inlined_call_operand.hbm [shape: f32[2,16,32], index: 1, kind: input, shape index: {}]
  %s2 = inlined_call_operand.hbm [shape: f32[2,8,32], index: 2, kind: output, shape index: {}]
  %s3 = sld [smem:[#allocation0]]
  $region22: #{tpu_custom_call.1} parent=0
    _
  %s5 = ssub.s32 1, %s3
  %s6 = scalar_select 0, %s5, %s3
  $region1: #{tpu_custom_call.1} parent=0
    #allocation2 [shape = 'u8[16384]{0}', space=vmem, size = 0x4000, scoped, tag = 'input window, operand 1, single buffered']
    #allocation3 [shape = 's32[1]{0}', space=sflag, size = 0x4, scoped, tag = 'scoped memory for tpu_custom_call.1']
    #allocation4 [shape = 's32[1]{0}', space=sflag, size = 0x4, scoped, tag = 'scoped memory for tpu_custom_call.1']
    #allocation5 [shape = 'u8[8192]{0}', space=vmem, size = 0x2000, scoped, tag = 'output window, operand 0, single buffered']
    %7 = vsyncpa [#allocation3], 0
    %8 = vsyncpa [#allocation4], 0
    // Predicated region
    $region2: #{tpu_custom_call.1} parent=1 // pred_check
      _
    $region3: #{tpu_custom_call.1} parent=1 // pred_check_branch
      %10 = sbr.rel (0) target = $region5
    $region4: #{tpu_custom_call.1} parent=1 // pred_region
      _
    $region5: #{tpu_custom_call.1} parent=1 // pred_fallthru
      _
    // Predicated region
    $region6: #{tpu_custom_call.1} parent=1 // pred_check
      _
    $region7: #{tpu_custom_call.1} parent=1 // pred_check_branch
      %12 = sbr.rel (0) target = $region9
    $region8: #{tpu_custom_call.1} parent=1 // pred_region
      %14 = vsyncadd [#allocation3], 0
      %s15 = sshll.u32 %s1, 4
      %s16 = int_to_ptr.hbm [resolvable:$true] %s15
      %s17 = sshll.u32 [#allocation2], 4
      %s18 = int_to_ptr.vmem [resolvable:$true] %s17
      %23 = dma.hbm_to_vmem [thread:$0]  %s16, 512, %s18, [#allocation3], 128, 128, 8
    $region9: #{tpu_custom_call.1} parent=1 // pred_fallthru
      _
    // Predicated region
    $region10: #{tpu_custom_call.1} parent=1 // pred_check
      _
    $region11: #{tpu_custom_call.1} parent=1 // pred_check_branch
      %25 = sbr.rel (0) target = $region13
    $region12: #{tpu_custom_call.1} parent=1 // pred_region
      %27 = dma.done [#allocation3], 512
    $region13: #{tpu_custom_call.1} parent=1 // pred_fallthru
      _
    %v29 = vlaneseq
    %v30 = vand.u32 %v29, 127
    %v31 = vld [vmem:[%s0] sm:$0xff]
    %v32 = vld [vmem:[%s0 + $0x8] sm:$0xff]
    %33 = vset.pattern.permute.xlu0 0
    %34 = vperm.xlu0 %33, %v31
    %v35 = vpop.permute.xlu0 %34
    %36 = vset.pattern.permute.xlu0 0
    %37 = vperm.xlu0 %36, %v32
    %v38 = vpop.permute.xlu0 %37
    %vm39 = vcmp.eq.s32.totalorder %v35, %v30
    %vm40 = vcmp.eq.s32.totalorder %v38, %v30
    %v41 = vsel %vm39, 1.0, 0.0
    %v42 = vsel %vm40, 1.0, 0.0
    %v43 = vpack.c.bf16 %v41, %v41
    %v44 = vpack.c.bf16 %v42, %v42
    %v45 = vld [vmem:[#allocation2] sm:$0xff]
    %v46 = vld [vmem:[#allocation2 + $0x8] sm:$0xff]
    %v47 = vld [vmem:[#allocation2 + $0x10] sm:$0xff]
    %v48 = vld [vmem:[#allocation2 + $0x18] sm:$0xff]
    %v49 = vpack.c.bf16 %v45, %v45
    %v50 = vpack.c.bf16 %v46, %v46
    %v51 = vpack.c.bf16 %v47, %v47
    %v52 = vpack.c.bf16 %v48, %v48
    %v53 = vunpack.c.l.bf16 %v49
    %v54 = vunpack.c.l.bf16 %v50
    %v55 = vunpack.c.l.bf16 %v51
    %v56 = vunpack.c.l.bf16 %v52
    %v57 = vsub.f32 %v45, %v53
    %v58 = vsub.f32 %v46, %v54
    %v59 = vsub.f32 %v47, %v55
    %v60 = vsub.f32 %v48, %v56
    %v61 = vpack.c.bf16 %v57, %v57
    %v62 = vpack.c.bf16 %v58, %v58
    %v63 = vpack.c.bf16 %v59, %v59
    %v64 = vpack.c.bf16 %v60, %v60
    %v65 = vunpack.c.l.bf16 %v61
    %v66 = vunpack.c.l.bf16 %v62
    %v67 = vunpack.c.l.bf16 %v63
    %v68 = vunpack.c.l.bf16 %v64
    %v69 = vsub.f32 %v57, %v65
    %v70 = vsub.f32 %v58, %v66
    %v71 = vsub.f32 %v59, %v67
    %v72 = vsub.f32 %v60, %v68
    %v73 = vpack.c.bf16 %v69, %v69
    %v74 = vpack.c.bf16 %v70, %v70
    %v75 = vpack.c.bf16 %v71, %v71
    %v76 = vpack.c.bf16 %v72, %v72
    %v79 = vunpack.c.l.b16 %v61
    %v80 = vunpack.c.l.b16 %v62
    %v81 = vpack.c.b16 %v80, %v79
    %vm83 = vcmask 130048
    %v85 = vsel %vm83, %v43, 0
    %87 = vmatpush.bf16.msra.mxu0 0
    %88 = vmatpush.bf16.msra.mxu0 0
    %89 = vmatpush.bf16.msra.mxu0 0
    %90 = vmatpush.bf16.msra.mxu0 0
    %91 = vmatpush.bf16.msra.mxu0 0
    %92 = vmatpush.bf16.msra.mxu0 0
    %93 = vmatpush.bf16.msra.mxu0 0
    %94 = vmatpush.bf16.msra.mxu0 %v81
    %95 = vmatmul.bf16.gmra.mxu0 %v85
    %v96 = vpop.f32.mrf.mxu0
    %v97 = vadd.f32 0.0, %v96
    %v98 = vpop.f32.mrf.mxu0
    %99 = vdwg.mxu0
    %v102 = vunpack.c.l.b16 %v63
    %v103 = vunpack.c.l.b16 %v64
    %v104 = vpack.c.b16 %v103, %v102
    %v107 = vsel %vm83, %v44, 0
    %109 = vmatpush.bf16.msra.mxu0 0
    %110 = vmatpush.bf16.msra.mxu0 0
    %111 = vmatpush.bf16.msra.mxu0 0
    %112 = vmatpush.bf16.msra.mxu0 0
    %113 = vmatpush.bf16.msra.mxu0 0
    %114 = vmatpush.bf16.msra.mxu0 0
    %115 = vmatpush.bf16.msra.mxu0 0
    %116 = vmatpush.bf16.msra.mxu0 %v104
    %117 = vmatmul.bf16.gmra.mxu0 %v107
    %v118 = vpop.f32.mrf.mxu0
    %v119 = vadd.f32 0.0, %v118
    %v120 = vpop.f32.mrf.mxu0
    %121 = vdwg.mxu0
    %v124 = vunpack.c.l.b16 %v49
    %v125 = vunpack.c.l.b16 %v50
    %v126 = vpack.c.b16 %v125, %v124
    %128 = vmatpush.bf16.msra.mxu0 0
    %129 = vmatpush.bf16.msra.mxu0 0
    %130 = vmatpush.bf16.msra.mxu0 0
    %131 = vmatpush.bf16.msra.mxu0 0
    %132 = vmatpush.bf16.msra.mxu0 0
    %133 = vmatpush.bf16.msra.mxu0 0
    %134 = vmatpush.bf16.msra.mxu0 0
    %135 = vmatpush.bf16.msra.mxu0 %v126
    %136 = vmatmul.bf16.gmra.mxu0 %v85
    %v137 = vpop.f32.mrf.mxu0
    %v138 = vadd.f32 %v97, %v137
    %v139 = vpop.f32.mrf.mxu0
    %140 = vdwg.mxu0
    %v143 = vunpack.c.l.b16 %v51
    %v144 = vunpack.c.l.b16 %v52
    %v145 = vpack.c.b16 %v144, %v143
    %147 = vmatpush.bf16.msra.mxu0 0
    %148 = vmatpush.bf16.msra.mxu0 0
    %149 = vmatpush.bf16.msra.mxu0 0
    %150 = vmatpush.bf16.msra.mxu0 0
    %151 = vmatpush.bf16.msra.mxu0 0
    %152 = vmatpush.bf16.msra.mxu0 0
    %153 = vmatpush.bf16.msra.mxu0 0
    %154 = vmatpush.bf16.msra.mxu0 %v145
    %155 = vmatmul.bf16.gmra.mxu0 %v107
    %v156 = vpop.f32.mrf.mxu0
    %v157 = vadd.f32 %v119, %v156
    %v158 = vpop.f32.mrf.mxu0
    %159 = vdwg.mxu0
    %v162 = vunpack.c.l.b16 %v73
    %v163 = vunpack.c.l.b16 %v74
    %v164 = vpack.c.b16 %v163, %v162
    %166 = vmatpush.bf16.msra.mxu0 0
    %167 = vmatpush.bf16.msra.mxu0 0
    %168 = vmatpush.bf16.msra.mxu0 0
    %169 = vmatpush.bf16.msra.mxu0 0
    %170 = vmatpush.bf16.msra.mxu0 0
    %171 = vmatpush.bf16.msra.mxu0 0
    %172 = vmatpush.bf16.msra.mxu0 0
    %173 = vmatpush.bf16.msra.mxu0 %v164
    %174 = vmatmul.bf16.gmra.mxu0 %v85
    %v175 = vpop.f32.mrf.mxu0
    %v176 = vadd.f32 0.0, %v175
    %v177 = vpop.f32.mrf.mxu0
    %178 = vdwg.mxu0
    %v181 = vunpack.c.l.b16 %v75
    %v182 = vunpack.c.l.b16 %v76
    %v183 = vpack.c.b16 %v182, %v181
    %185 = vmatpush.bf16.msra.mxu0 0
    %186 = vmatpush.bf16.msra.mxu0 0
    %187 = vmatpush.bf16.msra.mxu0 0
    %188 = vmatpush.bf16.msra.mxu0 0
    %189 = vmatpush.bf16.msra.mxu0 0
    %190 = vmatpush.bf16.msra.mxu0 0
    %191 = vmatpush.bf16.msra.mxu0 0
    %192 = vmatpush.bf16.msra.mxu0 %v183
    %193 = vmatmul.bf16.gmra.mxu0 %v107
    %v194 = vpop.f32.mrf.mxu0
    %v195 = vadd.f32 0.0, %v194
    %v196 = vpop.f32.mrf.mxu0
    %197 = vdwg.mxu0
    %v198 = vadd.f32 %v138, %v176
    %v199 = vadd.f32 %v157, %v195
    %vm200 = vcmask 261120
    %201 = vst.msk [vmem:[#allocation5] sm:$0xff] %vm200, %v198
    %202 = vst.msk [vmem:[#allocation5 + $0x8] sm:$0xff] %vm200, %v199
    // Predicated region
    $region14: #{tpu_custom_call.1} parent=1 // pred_check
      _
    $region15: #{tpu_custom_call.1} parent=1 // pred_check_branch
      %204 = sbr.rel (0) target = $region17
    $region16: #{tpu_custom_call.1} parent=1 // pred_region
      %206 = vsyncadd [#allocation4], 0
      %s207 = sshll.u32 [#allocation5], 4
      %s208 = int_to_ptr.vmem [resolvable:$true] %s207
      %s209 = sshll.u32 %s2, 4
      %s210 = int_to_ptr.hbm [resolvable:$true] %s209
      %215 = dma.vmem_to_hbm [thread:$0]  %s208, 256, %s210, [#allocation4], 128, 128, 8
    $region17: #{tpu_custom_call.1} parent=1 // pred_fallthru
      _
    // Predicated region
    $region18: #{tpu_custom_call.1} parent=1 // pred_check
      _
    $region19: #{tpu_custom_call.1} parent=1 // pred_check_branch
      %217 = sbr.rel (0) target = $region21
    $region20: #{tpu_custom_call.1} parent=1 // pred_region
      %219 = dma.done [#allocation4], 256
    $region21: #{tpu_custom_call.1} parent=1 // pred_fallthru
      _
    %220 = vsyncpa [#allocation3], 1
    %221 = vsyncpa [#allocation4], 1

</llo_original>
